<compile_context>
chip_gen: v5e
topology: v5e:2x2
jax: 0.10.0
libtpu: 0.0.40
codegen_flags: <defaults>
</compile_context>

<pallas_src>
import jax
import jax.numpy as jnp
from jax.experimental import pallas as pl
from jax.experimental.pallas import tpu as pltpu


def _round_up(x: int, m: int) -> int:
    return ((x + m - 1) // m) * m


def _vmem_limit_bytes() -> int:
    """Generation-dependent scoped-VMEM budget: ~96 MiB on 128-MiB parts, ~48 MiB on v7x."""
    try:
        cap = int(pltpu.get_tpu_info().vmem_capacity_bytes)
    except Exception:
        cap = 64 * 1024 * 1024
    return max(32 * 1024 * 1024, min((cap * 3) // 4, 100 * 1024 * 1024))


# ----------------------------------------------------------------------------
# Kernel 1: K-folded initial-conv residual stack
#   x_folded: (rows, n_taps*D) bf16 (tap == drop_num placed first -> residual)
#   out      = residual + summed conv bias + x_folded @ W_packed   (f32 acc, bf16 out)
# ----------------------------------------------------------------------------
def _make_conv_kernel(d_model):
    def kernel(x_ref, w_ref, b_ref, o_ref):
        x = x_ref[...]                                       # (tile_m, n_taps*D) bf16
        acc = x[:, :d_model].astype(jnp.float32)             # residual path
        acc = acc + b_ref[...]                                # summed conv bias (f32)
        acc = acc + jnp.dot(x, w_ref[...], preferred_element_type=jnp.float32)
        o_ref[...] = acc.astype(o_ref.dtype)
    return kernel


def conv_forward(x_emb, w_packed, bias_sum, tap_order, drop_num, vmem_limit):
    """x_emb: (B, L_in, D) bf16 -> (B, L_in - drop_num, D) bf16."""
    B, L_in, D = x_emb.shape
    L_out = L_in - drop_num
    # Shift-and-concat fold (XLA glue). The per-segment overlapping conv windows of
    # the reference are exactly a full-sequence valid conv, so one fold suffices.
    xf = jnp.concatenate([x_emb[:, t:t + L_out, :] for t in tap_order], axis=-1)
    K = xf.shape[-1]
    rows = B * L_out
    tile_m = 256 if rows >= 256 else _round_up(rows, 16)
    rows_pad = _round_up(rows, tile_m)
    x2 = xf.reshape(rows, K)
    if rows_pad != rows:
        x2 = jnp.pad(x2, ((0, rows_pad - rows), (0, 0)))

    out = pl.pallas_call(
        _make_conv_kernel(D),
        grid=(rows_pad // tile_m,),
        in_specs=[pl.BlockSpec((tile_m, K), lambda i: (i, 0)),
                  pl.BlockSpec((K, D), lambda i: (0, 0)),     # grid-invariant weight
                  pl.BlockSpec((1, D), lambda i: (0, 0))],    # grid-invariant bias
        out_specs=pl.BlockSpec((tile_m, D), lambda i: (i, 0)),
        out_shape=jax.ShapeDtypeStruct((rows_pad, D), jnp.bfloat16),
        compiler_params=pltpu.CompilerParams(
            dimension_semantics=("parallel",),
            vmem_limit_bytes=vmem_limit),
    )(x2, w_packed, bias_sum)
    return out[:rows].reshape(B, L_out, D)


# ----------------------------------------------------------------------------
# Kernel 2: tiled output projection  (rows, D) @ (D, V_pad) + bias
#   Grid: vocab OUTER, rows INNER -> each weight block streamed once total.
# ----------------------------------------------------------------------------
def _proj_kernel(x_ref, w_ref, b_ref, o_ref):
    o_ref[...] = (jnp.dot(x_ref[...], w_ref[...], preferred_element_type=jnp.float32)
                  + b_ref[...]).astype(o_ref.dtype)


def proj_out(h, w_t, bias, tile_v, vocab_size, vmem_limit):
    """h: (B, L, D) -> logits (B, L, vocab_size) f32."""
    B, L, D = h.shape
    V_pad = w_t.shape[1]
    rows = B * L
    tile_m = 256 if rows >= 256 else _round_up(rows, 16)
    rows_pad = _round_up(rows, tile_m)

    h2 = h.reshape(rows, D).astype(jnp.bfloat16)
    if rows_pad != rows:
        h2 = jnp.pad(h2, ((0, rows_pad - rows), (0, 0)))

    out = pl.pallas_call(
        _proj_kernel,
        grid=(V_pad // tile_v, rows_pad // tile_m),           # vocab outer, rows inner
        in_specs=[pl.BlockSpec((tile_m, D), lambda j, i: (i, 0)),
                  pl.BlockSpec((D, tile_v), lambda j, i: (0, j)),   # constant on inner axis
                  pl.BlockSpec((1, tile_v), lambda j, i: (0, j))],
        out_specs=pl.BlockSpec((tile_m, tile_v), lambda j, i: (i, j)),
        out_shape=jax.ShapeDtypeStruct((rows_pad, V_pad), jnp.float32),
        compiler_params=pltpu.CompilerParams(
            dimension_semantics=("parallel", "parallel"),
            vmem_limit_bytes=vmem_limit),
    )(h2, w_t, bias)
    return out[:rows, :vocab_size].reshape(B, L, vocab_size)


# ----------------------------------------------------------------------------
# Model (parameter construction + forward orchestration; hot paths in Pallas)
# ----------------------------------------------------------------------------
class OmLLM:
    def __init__(self, num_layers, vocab_size, dim_input, segment_len, state_len,
                 init_convs=(), final_mlp_multiplier=1, key=None):
        vocab_offset = 32 - dim_input % 32
        if vocab_offset == 32:
            vocab_offset = 0
        self.vocab_offset = vocab_offset
        self.vocab_size = vocab_size + vocab_offset
        self.segment_len = segment_len
        self.state_len = state_len
        self.dim_input = dim_input
        self.num_layers = num_layers
        self.init_convs = tuple(sorted(init_convs))
        self.final_mlp_multiplier = final_mlp_multiplier
        self._vmem = _vmem_limit_bytes()

        keys = jax.random.split(key, 4 + 2 * len(self.init_convs))

        # torch.nn.Embedding with normal_(mean=0, std=sqrt(2/5)); bf16 copy for the
        # activation path (halves the gather/DMA bytes into the conv kernel).
        self.embed_table = (2.0 / 5.0) ** 0.5 * jax.random.normal(
            keys[0], (self.vocab_size, dim_input), jnp.float32)
        self.embed_table_bf16 = self.embed_table.astype(jnp.bfloat16)

        # Conv1d(dim_input, dim_input, k) stack, K-folded: per-offset (Cin, Cout)
        # matrices merged across convs and packed into one (n_taps*D, D) bf16 weight
        # + a single summed f32 (1, D) bias.
        drop_num = (max(self.init_convs) - 1) if self.init_convs else 0
        self.drop_num = drop_num
        self._convs_f32 = []          # kept in f32 for the reference check
        if self.init_convs:
            n_taps = drop_num + 1
            tap_order = (drop_num,) + tuple(range(drop_num))   # residual tap first
            merged = [jnp.zeros((dim_input, dim_input), jnp.float32)
                      for _ in range(n_taps)]
            bias_sum = jnp.zeros((1, dim_input), jnp.float32)
            for i, k in enumerate(self.init_convs):
                bound = 1.0 / (dim_input * k) ** 0.5
                w = jax.random.uniform(keys[1 + 2 * i], (k, dim_input, dim_input),
                                       jnp.float32, -bound, bound)
                b = jax.random.uniform(keys[2 + 2 * i], (1, dim_input),
                                       jnp.float32, -bound, bound)
                self._convs_f32.append((k, w, b))
                bias_sum = bias_sum + b
                for j in range(k):
                    t = drop_num - (k - 1) + j
                    merged[t] = merged[t] + w[j]
            self.conv_tap_order = tap_order
            self.conv_w_packed = jnp.concatenate(
                [merged[t] for t in tap_order], axis=0).astype(jnp.bfloat16)
            self.conv_bias_sum = bias_sum
        else:
            self.conv_tap_order = ()
            self.conv_w_packed = None
            self.conv_bias_sum = None

        # Linear(dim_input * final_mlp_multiplier, vocab_size):
        #   weight stored transposed, bf16, vocab padded to a lane-dense multiple;
        #   -inf vocab-offset mask baked into the f32 bias.
        d_out_in = dim_input * final_mlp_multiplier
        bound = 1.0 / d_out_in ** 0.5
        v128 = _round_up(self.vocab_size, 128)
        self.tile_v = min(v128, 1024)
        self.vocab_pad = _round_up(self.vocab_size, self.tile_v)

        w = jax.random.uniform(keys[-2], (d_out_in, self.vocab_size),
                               jnp.float32, -bound, bound)
        b = jax.random.uniform(keys[-1], (self.vocab_size,),
                               jnp.float32, -bound, bound)
        self._proj_w_f32 = w
        self._proj_b_f32 = b
        b_masked = b
        if self.vocab_offset > 0:
            b_masked = b.at[self.vocab_size - self.vocab_offset:].set(-jnp.inf)
        w_pad = jnp.zeros((d_out_in, self.vocab_pad), jnp.float32)
        w_pad = w_pad.at[:, :self.vocab_size].set(w)
        b_pad = jnp.zeros((1, self.vocab_pad), jnp.float32)
        b_pad = b_pad.at[0, :self.vocab_size].set(b_masked)
        self.proj_w_t = w_pad.astype(jnp.bfloat16)
        self.proj_b = b_pad

    # ------------------------------------------------------------------
    def _project(self, h):
        return proj_out(h, self.proj_w_t, self.proj_b, self.tile_v,
                        self.vocab_size, self._vmem)

    def __call__(self, x, states=(), offset=0, next_token=False):
        B, seq_full = x.shape
        drop_num = self.drop_num
        seq_len = seq_full - drop_num

        if len(states) == 0:
            # TODO(synk): ARCformer attn.init_state shape not defined in the reference
            # module; using zero placeholder states of shape (1, state_len, dim_input).
            states = [jnp.zeros((1, self.state_len, self.dim_input), jnp.float32)
                      for _ in range(self.num_layers)]

        num_segments, rem = divmod(seq_len, self.segment_len)
        if rem > 0:
            num_segments += 1

        # Embedding gather for the full sequence (XLA glue, bf16), then ONE fused
        # K-folded conv kernel over the whole sequence.
        x_emb = jnp.take(self.embed_table_bf16, x, axis=0)       # (B, seq_full, D) bf16
        if self.init_convs:
            h_full = conv_forward(x_emb, self.conv_w_packed, self.conv_bias_sum,
                                  self.conv_tap_order, drop_num, self._vmem)
        else:
            h_full = x_emb

        # Segment loop: (placeholder) ARCformer layers update states per segment.
        # Only D-wide activations are collected; the V-wide projection runs once.
        seg_acts = []
        ix_hi = 0
        for segment_num in range(num_segments):
            ix_lo = ix_hi
            ix_hi = min(ix_lo + self.segment_len, seq_len + drop_num)
            if self.init_convs:
                if segment_num > 0:
                    conv_offset_lo, conv_offset_hi = drop_num, 0
                else:
                    conv_offset_lo, conv_offset_hi = 0, drop_num
            else:
                conv_offset_lo = conv_offset_hi = 0
            ix_lo = ix_lo - conv_offset_lo
            ix_hi = ix_hi + conv_offset_hi

            lo = segment_num * self.segment_len
            hi = min(lo + self.segment_len, seq_len)
            x_seg = h_full[:, lo:hi, :]

            states_next = []
            for state in states:
                # TODO(synk): ARCformer layer (attention memory + MLP) not provided in
                # the reference module; treated as identity on activations and state.
                states_next.append(state)
            states = states_next
            seg_acts.append(x_seg)

        if next_token:
            out = self._project(seg_acts[-1][:, -1:, :])[:, 0, :]
        else:
            h = jnp.concatenate(seg_acts, axis=1) if len(seg_acts) > 1 else seg_acts[0]
            out = self._project(h)
        return out, states, ix_hi


# ----------------------------------------------------------------------------
# Pure-jnp f32 reference mirroring the PyTorch module (identity ARCformer layers)
# ----------------------------------------------------------------------------
def reference_forward(model, x):
    B, seq_full = x.shape
    drop_num = model.drop_num
    seq_len = seq_full - drop_num
    num_segments, rem = divmod(seq_len, model.segment_len)
    if rem > 0:
        num_segments += 1
    emb = jnp.take(model.embed_table, x, axis=0)                 # f32
    outs = []
    ix_hi = 0
    for s in range(num_segments):
        ix_lo = ix_hi
        ix_hi = min(ix_lo + model.segment_len, seq_len + drop_num)
        if model.init_convs:
            off_lo, off_hi = ((drop_num, 0) if s > 0 else (0, drop_num))
        else:
            off_lo = off_hi = 0
        ix_lo -= off_lo
        ix_hi += off_hi
        x_seg = emb[:, ix_lo:ix_hi, :]
        if model.init_convs:
            x0 = x_seg
            acc = x0
            for k, w, b in model._convs_f32:
                Lc = x0.shape[1] - (k - 1)
                conv = sum(jnp.einsum('bld,de->ble', x0[:, j:j + Lc, :], w[j])
                           for j in range(k)) + b
                acc = acc.at[:, k - 1:, :].add(conv)
            x_seg = acc[:, drop_num:, :]
        outs.append(jnp.einsum('bld,dv->blv', x_seg, model._proj_w_f32)
                    + model._proj_b_f32)
    out = jnp.concatenate(outs, axis=1)
    if model.vocab_offset > 0:
        out = out.at[:, :, -model.vocab_offset:].set(-jnp.inf)
    return out, ix_hi


# ----------------------------------------------------------------------------
if __name__ == "__main__":
    key = jax.random.PRNGKey(0)
    k_model, k_data = jax.random.split(key)

    B, seq_full = 2, 21       # 21 - drop_num(2) = 19 -> 3 segments (exercises remainder)
    dim_input = 48            # vocab_offset = 32 - 48 % 32 = 16 (exercises masking)
    vocab_raw = 100
    segment_len = 8

    model = OmLLM(num_layers=2, vocab_size=vocab_raw, dim_input=dim_input,
                  segment_len=segment_len, state_len=4, init_convs=(2, 3),
                  final_mlp_multiplier=1, key=k_model)

    tokens = jax.random.randint(k_data, (B, seq_full), 0, vocab_raw, dtype=jnp.int32)

    logits, states, ix_hi = model(tokens)
    logits = jax.block_until_ready(logits)

    drop_num = max(model.init_convs) - 1
    assert logits.shape == (B, seq_full - drop_num, model.vocab_size), logits.shape
    assert ix_hi == seq_full
    assert bool(jnp.all(jnp.isneginf(logits[:, :, -model.vocab_offset:])))
    assert bool(jnp.all(jnp.isfinite(logits[:, :, :-model.vocab_offset])))

    # Numeric check against the pure-JAX f32 reference (bf16 compute -> loose tol).
    ref_logits, ref_ix_hi = reference_forward(model, tokens)
    assert ref_ix_hi == ix_hi
    fin = model.vocab_size - model.vocab_offset
    max_diff = float(jnp.max(jnp.abs(logits[:, :, :fin] - ref_logits[:, :, :fin])))
    assert max_diff < 0.1, f"max |pallas - ref| = {max_diff}"

    # next-token (decode) path
    nt_logits, _, _ = model(tokens, next_token=True)
    nt_logits = jax.block_until_ready(nt_logits)
    assert nt_logits.shape == (B, model.vocab_size), nt_logits.shape

    print("KERNEL_OK")
</pallas_src>

<mosaic_0001>
module attributes {stable_mosaic.version = 11 : i64} {
  func.func @kernel(%arg0: i32, %arg1: memref<48x144xbf16, #tpu.memory_space<vmem>>, %arg2: memref<144x48xbf16, #tpu.memory_space<vmem>>, %arg3: memref<1x48xf32, #tpu.memory_space<vmem>>, %arg4: memref<48x48xbf16, #tpu.memory_space<vmem>>) attributes {dimension_semantics = [#tpu.dimension_semantics<parallel>], iteration_bounds = array<i64: 1>, scalar_prefetch = 0 : i64, scratch_operands = 0 : i64, tpu.core_type = #tpu.core_type<tc>, window_params = [{transform_indices = @transform_0, window_bounds = array<i64: 48, 144>}, {pipeline_mode = #tpu.pipeline_mode<synchronous>, transform_indices = @transform_1, window_bounds = array<i64: 144, 48>}, {pipeline_mode = #tpu.pipeline_mode<synchronous>, transform_indices = @transform_2, window_bounds = array<i64: 1, 48>}, {transform_indices = @transform_3, window_bounds = array<i64: 48, 48>}]} {
    %c0 = arith.constant 0 : index
    %c0_0 = arith.constant 0 : index
    %0 = vector.load %arg1[%c0, %c0_0] : memref<48x144xbf16, #tpu.memory_space<vmem>>, vector<48x144xbf16>
    %1 = vector.extract_strided_slice %0 {offsets = [0, 0], sizes = [48, 48], strides = [1, 1]} : vector<48x144xbf16> to vector<48x48xbf16>
    %2 = arith.extf %1 : vector<48x48xbf16> to vector<48x48xf32>
    %c0_1 = arith.constant 0 : index
    %c0_2 = arith.constant 0 : index
    %3 = vector.load %arg3[%c0_1, %c0_2] : memref<1x48xf32, #tpu.memory_space<vmem>>, vector<1x48xf32>
    %4 = vector.broadcast %3 : vector<1x48xf32> to vector<48x48xf32>
    %5 = arith.addf %2, %4 : vector<48x48xf32>
    %c0_3 = arith.constant 0 : index
    %c0_4 = arith.constant 0 : index
    %6 = vector.load %arg2[%c0_3, %c0_4] : memref<144x48xbf16, #tpu.memory_space<vmem>>, vector<144x48xbf16>
    %cst = arith.constant dense<0.000000e+00> : vector<48x48xf32>
    %7 = tpu.matmul %0, %6, %cst {dimension_numbers = #tpu.dot_dimension_numbers<[1], [0], [0], [1], [0, 0, 1, 1], [], []>} : vector<48x144xbf16>, vector<144x48xbf16>, vector<48x48xf32> -> vector<48x48xf32>
    %8 = arith.addf %5, %7 : vector<48x48xf32>
    %9 = arith.truncf %8 : vector<48x48xf32> to vector<48x48xbf16>
    %c0_5 = arith.constant 0 : index
    %c0_6 = arith.constant 0 : index
    %10 = vector.load %arg4[%c0_5, %c0_6] : memref<48x48xbf16, #tpu.memory_space<vmem>>, vector<48x48xbf16>
    tpu.vector_store %arg4[%c0_5, %c0_6], %9 {strides = array<i32>} : memref<48x48xbf16, #tpu.memory_space<vmem>>, vector<48x48xbf16>,
    return
  }
  func.func @transform_0(%arg0: i32) -> (i32, i32) {
    %c0_i32 = arith.constant 0 : i32
    %c0_i32_0 = arith.constant 0 : i32
    return %arg0, %c0_i32 : i32, i32
  }
  func.func @transform_1(%arg0: i32) -> (i32, i32) {
    %c0_i32 = arith.constant 0 : i32
    %c0_i32_0 = arith.constant 0 : i32
    %c0_i32_1 = arith.constant 0 : i32
    return %c0_i32, %c0_i32_0 : i32, i32
  }
  func.func @transform_2(%arg0: i32) -> (i32, i32) {
    %c0_i32 = arith.constant 0 : i32
    %c0_i32_0 = arith.constant 0 : i32
    %c0_i32_1 = arith.constant 0 : i32
    return %c0_i32, %c0_i32_0 : i32, i32
  }
  func.func @transform_3(%arg0: i32) -> (i32, i32) {
    %c0_i32 = arith.constant 0 : i32
    %c0_i32_0 = arith.constant 0 : i32
    return %arg0, %c0_i32 : i32, i32
  }
}

</mosaic_0001>

<llo_original>
// kernel: tpu_custom_call.1
$region0: #{tpu_custom_call.1}
  #allocation0 [shape = 'u32[]', space=smem, size = 0x4, offset = 0x4, fixed_abs, tag = 'smem constant byte address 0x4 - core index']
  #allocation1 [shape = 'u32[72,128]{1,0:T(1,128)}', space=vmem, size = 0x9000, scoped, tag = 'internal scratch']
  %s0 = inlined_call_operand.vmem [shape: bf16[48,144], index: 0, kind: input, shape index: {}]
  %s1 = inlined_call_operand.vmem [shape: bf16[144,48], index: 1, kind: input, shape index: {}]
  %s2 = inlined_call_operand.vmem [shape: f32[1,48], index: 2, kind: input, shape index: {}]
  %s3 = inlined_call_operand.hbm [shape: bf16[48,48], index: 3, kind: output, shape index: {}]
  %s4 = sld [smem:[#allocation0]]
  $region22: #{tpu_custom_call.1} parent=0
    _
  %s6 = ssub.s32 1, %s4
  %s7 = scalar_select 0, %s6, %s4
  $region1: #{tpu_custom_call.1} parent=0
    #allocation2 [shape = 'u8[12288]{0}', space=vmem, size = 0x3000, scoped, tag = 'output window, operand 0, single buffered']
    #allocation3 [shape = 's32[1]{0}', space=sflag, size = 0x4, scoped, tag = 'scoped memory for tpu_custom_call.1']
    %8 = vsyncpa [#allocation3], 0
    // Predicated region
    $region2: #{tpu_custom_call.1} parent=1 // pred_check
      _
    $region3: #{tpu_custom_call.1} parent=1 // pred_check_branch
      %10 = sbr.rel (0) target = $region5
    $region4: #{tpu_custom_call.1} parent=1 // pred_region
      _
    $region5: #{tpu_custom_call.1} parent=1 // pred_fallthru
      _
    // Predicated region
    $region6: #{tpu_custom_call.1} parent=1 // pred_check
      _
    $region7: #{tpu_custom_call.1} parent=1 // pred_check_branch
      %12 = sbr.rel (0) target = $region9
    $region8: #{tpu_custom_call.1} parent=1 // pred_region
      _
    $region9: #{tpu_custom_call.1} parent=1 // pred_fallthru
      _
    // Predicated region
    $region10: #{tpu_custom_call.1} parent=1 // pred_check
      _
    $region11: #{tpu_custom_call.1} parent=1 // pred_check_branch
      %14 = sbr.rel (0) target = $region13
    $region12: #{tpu_custom_call.1} parent=1 // pred_region
      _
    $region13: #{tpu_custom_call.1} parent=1 // pred_fallthru
      _
    %v16 = vld [vmem:[%s0] sm:$0xff]
    %v17 = vld [vmem:[%s0 + $0x8] sm:$0xff]
    %v18 = vld [vmem:[%s0 + $0x10] sm:$0xff]
    %v19 = vld [vmem:[%s0 + $0x18] sm:$0xff]
    %v20 = vld [vmem:[%s0 + $0x20] sm:$0xff]
    %v21 = vld [vmem:[%s0 + $0x28] sm:$0xff]
    %v22 = vunpack.c.l.bf16 %v16
    %v23 = vunpack.c.l.bf16 %v17
    %v24 = vunpack.c.l.bf16 %v18
    %v25 = vunpack.c.l.bf16 %v19
    %v26 = vunpack.c.l.bf16 %v20
    %v27 = vunpack.c.l.bf16 %v21
    %v28 = vld [vmem:[%s2] sm:$0x1]
    %v30 = vperm.slane %v28, 0
    %v32 = vadd.f32 %v22, %v30
    %v33 = vadd.f32 %v23, %v30
    %v34 = vadd.f32 %v24, %v30
    %v35 = vadd.f32 %v25, %v30
    %v36 = vadd.f32 %v26, %v30
    %v37 = vadd.f32 %v27, %v30
    %v38 = vld [vmem:[%s1] sm:$0xf]
    %v39 = vld [vmem:[%s1 + $0x4] sm:$0xf]
    %v40 = vld [vmem:[%s1 + $0x8] sm:$0xf]
    %v41 = vld [vmem:[%s1 + $0xc] sm:$0xf]
    %v42 = vld [vmem:[%s1 + $0x10] sm:$0xf]
    %v43 = vld [vmem:[%s1 + $0x14] sm:$0xf]
    %v44 = vld [vmem:[%s1 + $0x18] sm:$0xf]
    %v45 = vld [vmem:[%s1 + $0x1c] sm:$0xf]
    %v46 = vld [vmem:[%s1 + $0x20] sm:$0xf]
    %v47 = vld [vmem:[%s1 + $0x24] sm:$0xf]
    %v48 = vld [vmem:[%s1 + $0x28] sm:$0xf]
    %v49 = vld [vmem:[%s1 + $0x2c] sm:$0xf]
    %v50 = vld [vmem:[%s1 + $0x30] sm:$0xf]
    %v51 = vld [vmem:[%s1 + $0x34] sm:$0xf]
    %v52 = vld [vmem:[%s1 + $0x38] sm:$0xf]
    %v53 = vld [vmem:[%s1 + $0x3c] sm:$0xf]
    %v54 = vld [vmem:[%s1 + $0x40] sm:$0xf]
    %v55 = vld [vmem:[%s1 + $0x44] sm:$0xf]
    %v62 = vunpack.c.l.b16 %v16
    %v63 = vunpack.c.h.b16 %v16
    %v64 = vunpack.c.l.b16 %v17
    %v65 = vunpack.c.h.b16 %v17
    %v66 = vunpack.c.l.b16 %v18
    %v67 = vunpack.c.h.b16 %v18
    %v68 = vunpack.c.l.b16 %v19
    %v69 = vunpack.c.h.b16 %v19
    %v70 = vunpack.c.l.b16 %v20
    %v71 = vunpack.c.h.b16 %v20
    %v72 = vunpack.c.l.b16 %v21
    %v73 = vunpack.c.h.b16 %v21
    %v74 = vpack.c.b16 %v64, %v62
    %v75 = vpack.c.b16 %v65, %v63
    %v76 = vpack.c.b16 %v68, %v66
    %v77 = vpack.c.b16 %v69, %v67
    %v78 = vpack.c.b16 %v72, %v70
    %v79 = vpack.c.b16 %v73, %v71
    %v101 = vunpack.c.l.b16 %v38
    %v102 = vunpack.c.l.b16 %v39
    %v103 = vunpack.c.l.b16 %v40
    %v104 = vunpack.c.l.b16 %v41
    %v105 = vunpack.c.l.b16 %v42
    %v106 = vunpack.c.l.b16 %v43
    %v107 = vunpack.c.l.b16 %v44
    %v108 = vunpack.c.l.b16 %v45
    %v109 = vunpack.c.l.b16 %v46
    %v110 = vunpack.c.l.b16 %v47
    %v111 = vunpack.c.l.b16 %v48
    %v112 = vunpack.c.l.b16 %v49
    %v113 = vunpack.c.l.b16 %v50
    %v114 = vunpack.c.l.b16 %v51
    %v115 = vunpack.c.l.b16 %v52
    %v116 = vunpack.c.l.b16 %v53
    %v117 = vunpack.c.l.b16 %v54
    %v118 = vunpack.c.l.b16 %v55
    %v119 = vpack.c.b16 %v102, %v101
    %v120 = vpack.c.b16 %v104, %v103
    %v121 = vpack.c.b16 %v106, %v105
    %v122 = vpack.c.b16 %v108, %v107
    %v123 = vpack.c.b16 %v110, %v109
    %v124 = vpack.c.b16 %v112, %v111
    %v125 = vpack.c.b16 %v114, %v113
    %v126 = vpack.c.b16 %v116, %v115
    %v127 = vpack.c.b16 %v118, %v117
    %vm137 = vcmask 130048
    %v139 = vsel %vm137, %v75, 0
    %v142 = vsel %vm137, %v77, 0
    %v145 = vsel %vm137, %v79, 0
    %147 = vmatpush.bf16.msra.mxu0 %v126
    %148 = vmatpush.bf16.msra.mxu0 %v125
    %149 = vmatpush.bf16.msra.mxu0 %v124
    %150 = vmatpush.bf16.msra.mxu0 %v123
    %151 = vmatpush.bf16.msra.mxu0 %v122
    %152 = vmatpush.bf16.msra.mxu0 %v121
    %153 = vmatpush.bf16.msra.mxu0 %v120
    %154 = vmatpush.bf16.msra.mxu0 %v119
    %155 = vmatmul.bf16.gmra.mxu0 %v74
    %v156 = vpop.f32.mrf.mxu0
    %v157 = vadd.f32 0.0, %v156
    %v158 = vpop.f32.mrf.mxu0
    %v159 = vadd.f32 0.0, %v158
    %160 = vmatmul.bf16.gmra.mxu0 %v76
    %v161 = vpop.f32.mrf.mxu0
    %v162 = vadd.f32 0.0, %v161
    %v163 = vpop.f32.mrf.mxu0
    %v164 = vadd.f32 0.0, %v163
    %165 = vmatmul.bf16.gmra.mxu0 %v78
    %v166 = vpop.f32.mrf.mxu0
    %v167 = vadd.f32 0.0, %v166
    %v168 = vpop.f32.mrf.mxu0
    %v169 = vadd.f32 0.0, %v168
    %170 = vdwg.mxu0
    %171 = vmatpush.bf16.msra.mxu0 0
    %172 = vmatpush.bf16.msra.mxu0 0
    %173 = vmatpush.bf16.msra.mxu0 0
    %174 = vmatpush.bf16.msra.mxu0 0
    %175 = vmatpush.bf16.msra.mxu0 0
    %176 = vmatpush.bf16.msra.mxu0 0
    %177 = vmatpush.bf16.msra.mxu0 0
    %178 = vmatpush.bf16.msra.mxu0 %v127
    %179 = vmatmul.bf16.gmra.mxu0 %v139
    %v180 = vpop.f32.mrf.mxu0
    %v181 = vadd.f32 %v157, %v180
    %v182 = vpop.f32.mrf.mxu0
    %v183 = vadd.f32 %v159, %v182
    %184 = vmatmul.bf16.gmra.mxu0 %v142
    %v185 = vpop.f32.mrf.mxu0
    %v186 = vadd.f32 %v162, %v185
    %v187 = vpop.f32.mrf.mxu0
    %v188 = vadd.f32 %v164, %v187
    %189 = vmatmul.bf16.gmra.mxu0 %v145
    %v190 = vpop.f32.mrf.mxu0
    %v191 = vadd.f32 %v167, %v190
    %v192 = vpop.f32.mrf.mxu0
    %v193 = vadd.f32 %v169, %v192
    %194 = vdwg.mxu0
    %v195 = vadd.f32 %v32, %v181
    %v196 = vadd.f32 %v33, %v183
    %v197 = vadd.f32 %v34, %v186
    %v198 = vadd.f32 %v35, %v188
    %v199 = vadd.f32 %v36, %v191
    %v200 = vadd.f32 %v37, %v193
    %v201 = vpack.c.bf16 %v195, %v195
    %v202 = vpack.c.bf16 %v196, %v196
    %v203 = vpack.c.bf16 %v197, %v197
    %v204 = vpack.c.bf16 %v198, %v198
    %v205 = vpack.c.bf16 %v199, %v199
    %v206 = vpack.c.bf16 %v200, %v200
    %vm207 = vcmask 388096
    %208 = vst.msk [vmem:[#allocation2] sm:$0xf] %vm207, %v201
    %209 = vst.msk [vmem:[#allocation2 + $0x4] sm:$0xf] %vm207, %v202
    %210 = vst.msk [vmem:[#allocation2 + $0x8] sm:$0xf] %vm207, %v203
    %211 = vst.msk [vmem:[#allocation2 + $0xc] sm:$0xf] %vm207, %v204
    %212 = vst.msk [vmem:[#allocation2 + $0x10] sm:$0xf] %vm207, %v205
    %213 = vst.msk [vmem:[#allocation2 + $0x14] sm:$0xf] %vm207, %v206
    // Predicated region
    $region14: #{tpu_custom_call.1} parent=1 // pred_check
      _
    $region15: #{tpu_custom_call.1} parent=1 // pred_check_branch
      %215 = sbr.rel (0) target = $region17
    $region16: #{tpu_custom_call.1} parent=1 // pred_region
      %217 = vsyncadd [#allocation3], 0
      %s218 = sshll.u32 [#allocation2], 4
      %s219 = int_to_ptr.vmem [resolvable:$true] %s218
      %s220 = sshll.u32 %s3, 4
      %s221 = int_to_ptr.hbm [resolvable:$true] %s220
      %226 = dma.vmem_to_hbm [thread:$0]  %s219, 384, %s221, [#allocation3], 64, 64, 4
    $region17: #{tpu_custom_call.1} parent=1 // pred_fallthru
      _
    // Predicated region
    $region18: #{tpu_custom_call.1} parent=1 // pred_check
      _
    $region19: #{tpu_custom_call.1} parent=1 // pred_check_branch
      %228 = sbr.rel (0) target = $region21
    $region20: #{tpu_custom_call.1} parent=1 // pred_region
      %230 = dma.done [#allocation3], 384
    $region21: #{tpu_custom_call.1} parent=1 // pred_fallthru
      _
    %231 = vsyncpa [#allocation3], 1

</llo_original>
